<compile_context>
chip_gen: v6e
topology: v6e:2x2x1
jax: 0.10.0
libtpu: 0.0.40
codegen_flags: <defaults>
</compile_context>

<pallas_src>
import functools

import jax
import jax.numpy as jnp
from jax import lax
from jax.experimental import pallas as pl
from jax.experimental.pallas import tpu as pltpu


def _round_up(x, m):
    return ((x + m - 1) // m) * m


def _image_formation_kernel(w_ref, r_ref, shd_ref, spec_ref, raw_ref, alb_ref):
    """One (batch, pixel-tile) grid step.

    w_ref   : (3, C)    per-channel weights e * [Sr; Sg; Sb], f32
    r_ref   : (C, TP)   spectral reflectance R_total (native dtype)
    shd_ref : (Cs, TP)  shading      (Cs in {1, 3})
    spec_ref: (Cp, TP)  specularity  (Cp in {1, 3})
    raw_ref : (3, TP)   rawAppearance  (output, f32)
    alb_ref : (3, TP)   diffuseAlbedo  (output, f32)
    """
    w = w_ref[...]
    r = r_ref[...].astype(jnp.float32)
    shd = shd_ref[...].astype(jnp.float32)
    spec = spec_ref[...].astype(jnp.float32)

    # 33 -> 3 contraction on the MXU (otherwise-idle vector-extended slot);
    # precision=HIGHEST keeps it f32-accurate.
    alb = jnp.dot(w, r, preferred_element_type=jnp.float32,
                  precision=lax.Precision.HIGHEST)           # (3, TP)

    alb_ref[...] = alb                       # single full (3, TP) block store
    raw_ref[...] = alb * shd + spec          # one broadcasted FMA over 3 rows


@functools.partial(jax.jit, static_argnames=("tile_p",))
def image_formation(specularity, e, Sr, Sg, Sb, R_total, shading, *,
                    tile_p=16384):
    """specularity/shading: (B,{1,3},H,W); e,Sr,Sg,Sb: (B,33); R_total: (B,33,H,W).

    Returns (rawAppearance, diffuseAlbedo), both (B, 3, H, W) float32.
    """
    B, C, H, W = R_total.shape
    P = H * W
    f32 = jnp.float32

    # Tiny precomputation: w[b, k, c] = e[b, c] * S_k[b, c]  -> (B, 3, C)
    S = jnp.stack([Sr.reshape(B, C), Sg.reshape(B, C), Sb.reshape(B, C)],
                  axis=1)
    w = (e.reshape(B, 1, C) * S).astype(f32)

    # Flatten pixels lane-dense; keep native dtypes (no HBM astype copies,
    # reshape is free).
    r = R_total.reshape(B, C, P)
    cs = shading.shape[1]
    cp = specularity.shape[1]
    shd = shading.reshape(B, cs, P)
    spec = specularity.reshape(B, cp, P)

    # Pixel tile: multiple of 128 lanes, as large as the v5e VMEM budget allows.
    tp = max(128, min(tile_p, _round_up(P, 128)))
    # Keep >= ~8 grid steps so megacore (v7x: 2 TCs) can shard the grid.
    if B * pl.cdiv(P, tp) < 8:
        want = pl.cdiv(P, max(1, pl.cdiv(8, B)))
        tp = max(128, min(tp, _round_up(want, 128)))
    grid = (B, pl.cdiv(P, tp))   # ragged last tile is masked by Pallas

    cost = pl.CostEstimate(
        flops=2 * B * P * 3 * C + 6 * B * P,
        transcendentals=0,
        bytes_accessed=(r.size * r.dtype.itemsize
                        + shd.size * shd.dtype.itemsize
                        + spec.size * spec.dtype.itemsize
                        + w.size * 4
                        + 2 * B * 3 * P * 4),
    )

    raw, alb = pl.pallas_call(
        _image_formation_kernel,
        out_shape=(jax.ShapeDtypeStruct((B, 3, P), f32),
                   jax.ShapeDtypeStruct((B, 3, P), f32)),
        grid_spec=pltpu.PrefetchScalarGridSpec(
            num_scalar_prefetch=0,
            grid=grid,
            in_specs=[
                pl.BlockSpec((None, 3, C), lambda b, t: (b, 0, 0)),    # e * S
                pl.BlockSpec((None, C, tp), lambda b, t: (b, 0, t)),   # R_total
                pl.BlockSpec((None, cs, tp), lambda b, t: (b, 0, t)),  # shading
                pl.BlockSpec((None, cp, tp), lambda b, t: (b, 0, t)),  # specularity
            ],
            out_specs=[
                pl.BlockSpec((None, 3, tp), lambda b, t: (b, 0, t)),   # rawAppearance
                pl.BlockSpec((None, 3, tp), lambda b, t: (b, 0, t)),   # diffuseAlbedo
            ],
        ),
        compiler_params=pltpu.CompilerParams(
            dimension_semantics=("parallel", "parallel")),
        cost_estimate=cost,
    )(w, r, shd, spec)

    return raw.reshape(B, 3, H, W), alb.reshape(B, 3, H, W)


def _reference(specularity, e, Sr, Sg, Sb, R_total, shading):
    """Pure-JAX mirror of the PyTorch forward."""
    B, C = R_total.shape[:2]
    e4 = e.reshape(B, C, 1, 1)
    Sr4 = Sr.reshape(B, C, 1, 1)
    Sg4 = Sg.reshape(B, C, 1, 1)
    Sb4 = Sb.reshape(B, C, 1, 1)
    spectraRef = R_total * e4
    Rch = jnp.sum(spectraRef * Sr4, axis=1, keepdims=True)
    Gch = jnp.sum(spectraRef * Sg4, axis=1, keepdims=True)
    Bch = jnp.sum(spectraRef * Sb4, axis=1, keepdims=True)
    diffuseAlbedo = jnp.concatenate([Rch, Gch, Bch], axis=1)
    rawAppearance = diffuseAlbedo * shading + specularity
    return rawAppearance, diffuseAlbedo


if __name__ == "__main__":
    key = jax.random.PRNGKey(0)
    ks = jax.random.split(key, 7)

    B, C, H, W = 2, 33, 16, 16
    specularity = jax.random.uniform(ks[0], (B, 1, H, W), jnp.float32)
    e = jax.random.uniform(ks[1], (B, C), jnp.float32)
    Sr = jax.random.uniform(ks[2], (B, C), jnp.float32)
    Sg = jax.random.uniform(ks[3], (B, C), jnp.float32)
    Sb = jax.random.uniform(ks[4], (B, C), jnp.float32)
    R_total = jax.random.uniform(ks[5], (B, C, H, W), jnp.float32)
    shading = jax.random.uniform(ks[6], (B, 1, H, W), jnp.float32)

    raw, alb = image_formation(specularity, e, Sr, Sg, Sb, R_total, shading)
    jax.block_until_ready(raw)
    jax.block_until_ready(alb)
    assert raw.shape == (B, 3, H, W), raw.shape
    assert alb.shape == (B, 3, H, W), alb.shape

    raw_ref, alb_ref = _reference(specularity, e, Sr, Sg, Sb, R_total, shading)
    err_raw = float(jnp.max(jnp.abs(raw - raw_ref)))
    err_alb = float(jnp.max(jnp.abs(alb - alb_ref)))
    assert jnp.allclose(alb, alb_ref, atol=1e-3, rtol=1e-3), err_alb
    assert jnp.allclose(raw, raw_ref, atol=1e-3, rtol=1e-3), err_raw

    print("KERNEL_OK")
</pallas_src>

<mosaic_0001>
module attributes {stable_mosaic.version = 11 : i64} {
  func.func @_image_formation_kernel(%arg0: i32, %arg1: i32, %arg2: memref<1x3x33xf32, #tpu.memory_space<vmem>>, %arg3: memref<1x33x128xf32, #tpu.memory_space<vmem>>, %arg4: memref<1x1x128xf32, #tpu.memory_space<vmem>>, %arg5: memref<1x1x128xf32, #tpu.memory_space<vmem>>, %arg6: memref<1x3x128xf32, #tpu.memory_space<vmem>>, %arg7: memref<1x3x128xf32, #tpu.memory_space<vmem>>) attributes {dimension_semantics = [#tpu.dimension_semantics<parallel>, #tpu.dimension_semantics<parallel>], iteration_bounds = array<i64: 2, 2>, scalar_prefetch = 0 : i64, scratch_operands = 0 : i64, tpu.core_type = #tpu.core_type<tc>, window_params = [{transform_indices = @transform_0, window_bounds = array<i64: 1, 3, 33>}, {transform_indices = @transform_1, window_bounds = array<i64: 1, 33, 128>}, {transform_indices = @transform_2, window_bounds = array<i64: 1, 1, 128>}, {transform_indices = @transform_3, window_bounds = array<i64: 1, 1, 128>}, {transform_indices = @transform_4, window_bounds = array<i64: 1, 3, 128>}, {transform_indices = @transform_5, window_bounds = array<i64: 1, 3, 128>}]} {
    %c0 = arith.constant 0 : index
    %c0_0 = arith.constant 0 : index
    %c0_1 = arith.constant 0 : index
    %0 = vector.load %arg2[%c0, %c0_0, %c0_1] : memref<1x3x33xf32, #tpu.memory_space<vmem>>, vector<1x3x33xf32>
    %1 = vector.shape_cast %0 : vector<1x3x33xf32> to vector<3x33xf32>
    %c0_2 = arith.constant 0 : index
    %c0_3 = arith.constant 0 : index
    %c0_4 = arith.constant 0 : index
    %2 = vector.load %arg3[%c0_2, %c0_3, %c0_4] : memref<1x33x128xf32, #tpu.memory_space<vmem>>, vector<1x33x128xf32>
    %3 = vector.shape_cast %2 : vector<1x33x128xf32> to vector<33x128xf32>
    %c0_5 = arith.constant 0 : index
    %c0_6 = arith.constant 0 : index
    %c0_7 = arith.constant 0 : index
    %4 = vector.load %arg4[%c0_5, %c0_6, %c0_7] : memref<1x1x128xf32, #tpu.memory_space<vmem>>, vector<1x1x128xf32>
    %5 = vector.shape_cast %4 : vector<1x1x128xf32> to vector<1x128xf32>
    %c0_8 = arith.constant 0 : index
    %c0_9 = arith.constant 0 : index
    %c0_10 = arith.constant 0 : index
    %6 = vector.load %arg5[%c0_8, %c0_9, %c0_10] : memref<1x1x128xf32, #tpu.memory_space<vmem>>, vector<1x1x128xf32>
    %7 = vector.shape_cast %6 : vector<1x1x128xf32> to vector<1x128xf32>
    %cst = arith.constant dense<0.000000e+00> : vector<3x128xf32>
    %8 = tpu.matmul %1, %3, %cst {dimension_numbers = #tpu.dot_dimension_numbers<[1], [0], [0], [1], [0, 0, 1, 1], [], []>, precision = #tpu.contract_precision<fp32>} : vector<3x33xf32>, vector<33x128xf32>, vector<3x128xf32> -> vector<3x128xf32>
    %c0_11 = arith.constant 0 : index
    %c0_12 = arith.constant 0 : index
    %c0_13 = arith.constant 0 : index
    %9 = vector.load %arg7[%c0_11, %c0_12, %c0_13] : memref<1x3x128xf32, #tpu.memory_space<vmem>>, vector<1x3x128xf32>
    %10 = vector.shape_cast %9 : vector<1x3x128xf32> to vector<3x128xf32>
    %11 = vector.shape_cast %8 : vector<3x128xf32> to vector<1x3x128xf32>
    tpu.vector_store %arg7[%c0_11, %c0_12, %c0_13], %11 {strides = array<i32>} : memref<1x3x128xf32, #tpu.memory_space<vmem>>, vector<1x3x128xf32>,
    %12 = vector.broadcast %5 : vector<1x128xf32> to vector<3x128xf32>
    %13 = arith.mulf %8, %12 : vector<3x128xf32>
    %14 = vector.broadcast %7 : vector<1x128xf32> to vector<3x128xf32>
    %15 = arith.addf %13, %14 : vector<3x128xf32>
    %c0_14 = arith.constant 0 : index
    %c0_15 = arith.constant 0 : index
    %c0_16 = arith.constant 0 : index
    %16 = vector.load %arg6[%c0_14, %c0_15, %c0_16] : memref<1x3x128xf32, #tpu.memory_space<vmem>>, vector<1x3x128xf32>
    %17 = vector.shape_cast %16 : vector<1x3x128xf32> to vector<3x128xf32>
    %18 = vector.shape_cast %15 : vector<3x128xf32> to vector<1x3x128xf32>
    tpu.vector_store %arg6[%c0_14, %c0_15, %c0_16], %18 {strides = array<i32>} : memref<1x3x128xf32, #tpu.memory_space<vmem>>, vector<1x3x128xf32>,
    return
  }
  func.func @transform_0(%arg0: i32, %arg1: i32) -> (i32, i32, i32) {
    %c0_i32 = arith.constant 0 : i32
    %c0_i32_0 = arith.constant 0 : i32
    %c0_i32_1 = arith.constant 0 : i32
    return %arg0, %c0_i32, %c0_i32_0 : i32, i32, i32
  }
  func.func @transform_1(%arg0: i32, %arg1: i32) -> (i32, i32, i32) {
    %c0_i32 = arith.constant 0 : i32
    %c0_i32_0 = arith.constant 0 : i32
    return %arg0, %c0_i32, %arg1 : i32, i32, i32
  }
  func.func @transform_2(%arg0: i32, %arg1: i32) -> (i32, i32, i32) {
    %c0_i32 = arith.constant 0 : i32
    %c0_i32_0 = arith.constant 0 : i32
    return %arg0, %c0_i32, %arg1 : i32, i32, i32
  }
  func.func @transform_3(%arg0: i32, %arg1: i32) -> (i32, i32, i32) {
    %c0_i32 = arith.constant 0 : i32
    %c0_i32_0 = arith.constant 0 : i32
    return %arg0, %c0_i32, %arg1 : i32, i32, i32
  }
  func.func @transform_4(%arg0: i32, %arg1: i32) -> (i32, i32, i32) {
    %c0_i32 = arith.constant 0 : i32
    %c0_i32_0 = arith.constant 0 : i32
    return %arg0, %c0_i32, %arg1 : i32, i32, i32
  }
  func.func @transform_5(%arg0: i32, %arg1: i32) -> (i32, i32, i32) {
    %c0_i32 = arith.constant 0 : i32
    %c0_i32_0 = arith.constant 0 : i32
    return %arg0, %c0_i32, %arg1 : i32, i32, i32
  }
}

</mosaic_0001>

<llo_original>
// kernel: image_formation.1
$region0: #{image_formation.1}
  #allocation0 [shape = 'u32[]', space=smem, size = 0x4, offset = 0x4, fixed_abs, tag = 'smem constant byte address 0x4 - core index']
  #allocation1 [shape = 'u32[144,128]{1,0:T(1,128)}', space=vmem, size = 0x12000, scoped, tag = 'internal scratch']
  %s0 = inlined_call_operand.vmem [shape: f32[2,3,33], index: 0, kind: input, shape index: {}]
  %s1 = inlined_call_operand.vmem [shape: f32[2,33,256], index: 1, kind: input, shape index: {}]
  %s2 = inlined_call_operand.vmem [shape: f32[2,1,256], index: 2, kind: input, shape index: {}]
  %s3 = inlined_call_operand.vmem [shape: f32[2,1,256], index: 3, kind: input, shape index: {}]
  %s4 = inlined_call_operand.vmem [shape: f32[2,3,256], index: 4, kind: output, shape index: {0}]
  %s5 = inlined_call_operand.vmem [shape: f32[2,3,256], index: 5, kind: output, shape index: {1}]
  %6 = xla_tuple %s4, %s5
  %s7 = sld [smem:[#allocation0]]
  $region95: #{image_formation.1} parent=0
    _
  %s9 = ssub.s32 1, %s7
  %s10 = scalar_select 0, %s9, %s7
  $region1: #{image_formation.1} parent=0
    #allocation2 [shape = 'u8[40960]{0}', space=vmem, size = 0xa000, scoped, tag = 'input window, operand 1']
    loop: start=0, step=1, limit=6
    $region2: #{image_formation.1} parent=1 // loop_pre_header
      _
    $region3: #{image_formation.1} parent=1 // loop_header
      %s12 = sphi 0, %s16
      %p13 = scmp.ge.s32.totalorder %s12, 6
      %s19 = sphi 0, %s31
      %s20 = sphi 0, %s27
      %s21 = sphi 0, %s19
      %s22 = sphi 0, %s20
      %s23 = sphi 0, %s21
      %s24 = sphi 0, %s22
      %s34 = sphi 0, %s36
      %s37 = sphi 0, %s34
      %s38 = sphi 0, %s37
      %s54 = sphi 0, %s38
      %s62 = sphi 0, %s64
      %s65 = sphi 0, %s62
      %s66 = sphi 0, %s65
      %s82 = sphi 0, %s66
      %s90 = sphi 0, %s92
      %s93 = sphi 0, %s90
      %s94 = sphi 0, %s93
      %s110 = sphi 0, %s94
      %s118 = sphi 0, %s120
      %s121 = sphi 0, %s118
      %s122 = sphi 0, %s121
      %s138 = sphi 0, %s122
      %s146 = sphi 0, %s148
      %s149 = sphi 0, %s146
      %s150 = sphi 0, %s149
      %s166 = sphi 0, %s150
      %s174 = sphi 0, %s176
      %s177 = sphi 0, %s174
      %s178 = sphi 0, %s177
      %s194 = sphi 0, %s178
    $region4: #{image_formation.1} parent=1 // loop_header_branch
      %15 = sbr.rel (%p13) target = $region8
    $region5: #{image_formation.1} parent=1 // loop_body
      %s17 = ssub.s32 %s12, 1
      %s18 = ssub.s32 %s12, 2
      %s25 = sadd.s32 1, %s20
      %p26 = scmp.ge.s32.totalorder %s25, 2
      %s27 = scalar_select %p26, 0, %s25
      %s28 = sadd.s32 1, %s19
      %s29 = scalar_select %p26, %s28, %s19
      %p30 = scmp.ge.s32.totalorder %s29, 2
      %s31 = scalar_select %p30, 0, %s29
      %s32 = ssub.s32 %s19, %s31
      %p33 = scmp.eq.s32.totalorder %s32, 0
      %s35 = sadd.s32 %s34, 1
      %s36 = scalar_select %p33, %s34, %s35
      %p39 = pneg %p33
      %p40 = scmp.eq.s32.totalorder %s12, 3
      %p41 = por %p39, %p40
      %p42 = scmp.ne.s32.totalorder %s34, %s37
      %p43 = scmp.eq.s32.totalorder %s12, 0
      %p44 = por %p42, %p43
      %p45 = scmp.ne.s32.totalorder %s34, %s37
      %p46 = scmp.eq.s32.totalorder %s17, 3
      %p47 = por %p45, %p46
      %p48 = scmp.ne.s32.totalorder %s37, %s38
      %p49 = scmp.eq.s32.totalorder %s17, 0
      %p50 = por %p48, %p49
      %p51 = scmp.ne.s32.totalorder %s37, %s38
      %p52 = scmp.eq.s32.totalorder %s18, 3
      %p53 = por %p51, %p52
      %p55 = scmp.ne.s32.totalorder %s38, %s54
      %p56 = scmp.eq.s32.totalorder %s18, 0
      %p57 = por %p55, %p56
      %s58 = ssub.s32 %s19, %s31
      %s59 = ssub.s32 %s20, %s27
      %s60 = sor.u32 %s58, %s59
      %p61 = scmp.eq.s32.totalorder %s60, 0
      %s63 = sadd.s32 %s62, 1
      %s64 = scalar_select %p61, %s62, %s63
      %p67 = pneg %p61
      %p68 = scmp.eq.s32.totalorder %s12, 3
      %p69 = por %p67, %p68
      %p70 = scmp.ne.s32.totalorder %s62, %s65
      %p71 = scmp.eq.s32.totalorder %s12, 0
      %p72 = por %p70, %p71
      %p73 = scmp.ne.s32.totalorder %s62, %s65
      %p74 = scmp.eq.s32.totalorder %s17, 3
      %p75 = por %p73, %p74
      %p76 = scmp.ne.s32.totalorder %s65, %s66
      %p77 = scmp.eq.s32.totalorder %s17, 0
      %p78 = por %p76, %p77
      %p79 = scmp.ne.s32.totalorder %s65, %s66
      %p80 = scmp.eq.s32.totalorder %s18, 3
      %p81 = por %p79, %p80
      %p83 = scmp.ne.s32.totalorder %s66, %s82
      %p84 = scmp.eq.s32.totalorder %s18, 0
      %p85 = por %p83, %p84
      %s86 = ssub.s32 %s19, %s31
      %s87 = ssub.s32 %s20, %s27
      %s88 = sor.u32 %s86, %s87
      %p89 = scmp.eq.s32.totalorder %s88, 0
      %s91 = sadd.s32 %s90, 1
      %s92 = scalar_select %p89, %s90, %s91
      %p95 = pneg %p89
      %p96 = scmp.eq.s32.totalorder %s12, 3
      %p97 = por %p95, %p96
      %p98 = scmp.ne.s32.totalorder %s90, %s93
      %p99 = scmp.eq.s32.totalorder %s12, 0
      %p100 = por %p98, %p99
      %p101 = scmp.ne.s32.totalorder %s90, %s93
      %p102 = scmp.eq.s32.totalorder %s17, 3
      %p103 = por %p101, %p102
      %p104 = scmp.ne.s32.totalorder %s93, %s94
      %p105 = scmp.eq.s32.totalorder %s17, 0
      %p106 = por %p104, %p105
      %p107 = scmp.ne.s32.totalorder %s93, %s94
      %p108 = scmp.eq.s32.totalorder %s18, 3
      %p109 = por %p107, %p108
      %p111 = scmp.ne.s32.totalorder %s94, %s110
      %p112 = scmp.eq.s32.totalorder %s18, 0
      %p113 = por %p111, %p112
      %s114 = ssub.s32 %s19, %s31
      %s115 = ssub.s32 %s20, %s27
      %s116 = sor.u32 %s114, %s115
      %p117 = scmp.eq.s32.totalorder %s116, 0
      %s119 = sadd.s32 %s118, 1
      %s120 = scalar_select %p117, %s118, %s119
      %p123 = pneg %p117
      %p124 = scmp.eq.s32.totalorder %s12, 3
      %p125 = por %p123, %p124
      %p126 = scmp.ne.s32.totalorder %s118, %s121
      %p127 = scmp.eq.s32.totalorder %s12, 0
      %p128 = por %p126, %p127
      %p129 = scmp.ne.s32.totalorder %s118, %s121
      %p130 = scmp.eq.s32.totalorder %s17, 3
      %p131 = por %p129, %p130
      %p132 = scmp.ne.s32.totalorder %s121, %s122
      %p133 = scmp.eq.s32.totalorder %s17, 0
      %p134 = por %p132, %p133
      %p135 = scmp.ne.s32.totalorder %s121, %s122
      %p136 = scmp.eq.s32.totalorder %s18, 3
      %p137 = por %p135, %p136
      %p139 = scmp.ne.s32.totalorder %s122, %s138
      %p140 = scmp.eq.s32.totalorder %s18, 0
      %p141 = por %p139, %p140
      %s142 = ssub.s32 %s19, %s31
      %s143 = ssub.s32 %s20, %s27
      %s144 = sor.u32 %s142, %s143
      %p145 = scmp.eq.s32.totalorder %s144, 0
      %s147 = sadd.s32 %s146, 1
      %s148 = scalar_select %p145, %s146, %s147
      %p151 = pneg %p145
      %p152 = scmp.eq.s32.totalorder %s12, 3
      %p153 = por %p151, %p152
      %p154 = scmp.ne.s32.totalorder %s146, %s149
      %p155 = scmp.eq.s32.totalorder %s12, 0
      %p156 = por %p154, %p155
      %p157 = scmp.ne.s32.totalorder %s146, %s149
      %p158 = scmp.eq.s32.totalorder %s17, 3
      %p159 = por %p157, %p158
      %p160 = scmp.ne.s32.totalorder %s149, %s150
      %p161 = scmp.eq.s32.totalorder %s17, 0
      %p162 = por %p160, %p161
      %p163 = scmp.ne.s32.totalorder %s149, %s150
      %p164 = scmp.eq.s32.totalorder %s18, 3
      %p165 = por %p163, %p164
      %p167 = scmp.ne.s32.totalorder %s150, %s166
      %p168 = scmp.eq.s32.totalorder %s18, 0
      %p169 = por %p167, %p168
      %s170 = ssub.s32 %s19, %s31
      %s171 = ssub.s32 %s20, %s27
      %s172 = sor.u32 %s170, %s171
      %p173 = scmp.eq.s32.totalorder %s172, 0
      %s175 = sadd.s32 %s174, 1
      %s176 = scalar_select %p173, %s174, %s175
      %p179 = pneg %p173
      %p180 = scmp.eq.s32.totalorder %s12, 3
      %p181 = por %p179, %p180
      %p182 = scmp.ne.s32.totalorder %s174, %s177
      %p183 = scmp.eq.s32.totalorder %s12, 0
      %p184 = por %p182, %p183
      %p185 = scmp.ne.s32.totalorder %s174, %s177
      %p186 = scmp.eq.s32.totalorder %s17, 3
      %p187 = por %p185, %p186
      %p188 = scmp.ne.s32.totalorder %s177, %s178
      %p189 = scmp.eq.s32.totalorder %s17, 0
      %p190 = por %p188, %p189
      %p191 = scmp.ne.s32.totalorder %s177, %s178
      %p192 = scmp.eq.s32.totalorder %s18, 3
      %p193 = por %p191, %p192
      %p195 = scmp.ne.s32.totalorder %s178, %s194
      %p196 = scmp.eq.s32.totalorder %s18, 0
      %p197 = por %p195, %p196
      %p198 = scmp.le.s32.totalorder 1, %s12
      %p199 = scmp.lt.s32.totalorder %s12, 5
      %p200 = pnand %p198, %p199
      %p201 = pneg %p200
      // Predicated region
      $region9: #{image_formation.1} parent=5 // pred_check
        _
      $region10: #{image_formation.1} parent=5 // pred_check_branch
        %203 = sbr.rel (%p200) target = $region12
      $region11: #{image_formation.1} parent=5 // pred_region
        %s204 = ssub.s32 %s12, 1
      $region12: #{image_formation.1} parent=5 // pred_fallthru
        _
      %p205 = scmp.lt.s32.totalorder %s12, 4
      // Predicated region
      $region13: #{image_formation.1} parent=5 // pred_check
        %p206 = pneg %p205
      $region14: #{image_formation.1} parent=5 // pred_check_branch
        %208 = sbr.rel (%p206) target = $region16
      $region15: #{image_formation.1} parent=5 // pred_region
        // Predicated region
        $region17: #{image_formation.1} parent=15 // pred_check
          %p209 = pneg %p44
        $region18: #{image_formation.1} parent=15 // pred_check_branch
          %211 = sbr.rel (%p209) target = $region20
        $region19: #{image_formation.1} parent=15 // pred_region
          %p212 = scmp.lt.s32.totalorder %s19, 1
          %s213 = scalar_select %p212, %s19, 1
          %s214 = smul.addr %s213, 4
          %s215 = scalar_lea.vmem %s0, %s214
        $region20: #{image_formation.1} parent=15 // pred_fallthru
          _
        // Predicated region
        $region21: #{image_formation.1} parent=15 // pred_check
          %p216 = pneg %p72
        $region22: #{image_formation.1} parent=15 // pred_check_branch
          %218 = sbr.rel (%p216) target = $region24
        $region23: #{image_formation.1} parent=15 // pred_region
          %s219 = sand.u32 %s62, 1
          %s220 = sand.u32 %s62, 1
          %s221 = smul.addr %s220, 40
          %s222 = scalar_lea.vmem [#allocation2], %s221
          %s223 = smul.addr %s19, 10
          %s224 = sadd.s32 %s20, %s223
          %s225 = smul.addr %s224, 8
          %s226 = scalar_lea.vmem %s1, %s225
          // Predicated region
          $region25: #{image_formation.1} parent=23 // pred_check
            _
          $region26: #{image_formation.1} parent=23 // pred_check_branch
            %228 = sbr.rel (0) target = $region28
          $region27: #{image_formation.1} parent=23 // pred_region
            // Predicated region
            $region29: #{image_formation.1} parent=27 // pred_check
              _
            $region30: #{image_formation.1} parent=27 // pred_check_branch
              %230 = sbr.rel (0) target = $region32
            $region31: #{image_formation.1} parent=27 // pred_region
              // Predicated region
              $region44: #{image_formation.1} parent=31 // pred_check
                _
              $region45: #{image_formation.1} parent=31 // pred_check_branch
                %254 = sbr.rel (0) target = $region47
              $region46: #{image_formation.1} parent=31 // pred_region
                loop: start=0, step=1, limit=1
                $region48: #{image_formation.1} parent=46 // loop_pre_header
                  _
                $region49: #{image_formation.1} parent=46 // loop_header
                  %s256 = sphi 0, %s260
                  %p257 = scmp.ge.s32.totalorder %s256, 1
                  %s261 = sphi %s226, %s226
                  %s262 = sphi %s222, %s222
                $region50: #{image_formation.1} parent=46 // loop_header_branch
                  %259 = sbr.rel (%p257) target = $region54
                $region51: #{image_formation.1} parent=46 // loop_body
                  %v263 = vld [vmem:[%s261] sm:$0xff]
                  %264 = vst [vmem:[%s262] sm:$0xff] %v263
                  %v265 = vld [vmem:[%s261 + $0x10] sm:$0xff]
                  %266 = vst [vmem:[%s262 + $0x8] sm:$0xff] %v265
                  %v267 = vld [vmem:[%s261 + $0x20] sm:$0xff]
                  %268 = vst [vmem:[%s262 + $0x10] sm:$0xff] %v267
                  %v269 = vld [vmem:[%s261 + $0x30] sm:$0xff]
                  %270 = vst [vmem:[%s262 + $0x18] sm:$0xff] %v269
                  %v271 = vld [vmem:[%s261 + $0x40] sm:$0xff]
                  %272 = vst [vmem:[%s262 + $0x20] sm:$0xff] %v271
                $region52: #{image_formation.1} parent=46 // loop_footer
                  %s260 = sadd.s32 1, %s256
                $region53: #{image_formation.1} parent=46 // loop_footer_branch
                  %255 = sbr.rel target = $region49
                $region54: #{image_formation.1} parent=46 // loop_exit
                  _
              $region47: #{image_formation.1} parent=31 // pred_fallthru
                _
              // Predicated region
              $region55: #{image_formation.1} parent=31 // pred_check
                _
              $region56: #{image_formation.1} parent=31 // pred_check_branch
                %274 = sbr.rel target = $region58
              $region57: #{image_formation.1} parent=31 // pred_region
                _
              $region58: #{image_formation.1} parent=31 // pred_fallthru
                _
            $region32: #{image_formation.1} parent=27 // pred_fallthru
              _
            // Predicated region
            $region33: #{image_formation.1} parent=27 // pred_check
              _
            $region34: #{image_formation.1} parent=27 // pred_check_branch
              %232 = sbr.rel target = $region36
            $region35: #{image_formation.1} parent=27 // pred_region
              %s234 = ssub.s32 256, 1
              loop: start=0, step=1, limit=1
              $region37: #{image_formation.1} parent=35 // loop_pre_header
                _
              $region38: #{image_formation.1} parent=35 // loop_header
                %s236 = sphi 0, %s240
                %p237 = scmp.ge.s32.totalorder %s236, 1
                %s241 = sphi %s226, %s226
                %s242 = sphi %s222, %s222
              $region39: #{image_formation.1} parent=35 // loop_header_branch
                %239 = sbr.rel (%p237) target = $region43
              $region40: #{image_formation.1} parent=35 // loop_body
                %v243 = vld [vmem:[%s241] sm:%s234]
                %244 = vst [vmem:[%s242] sm:%s234] %v243
                %v245 = vld [vmem:[%s241 + $0x10] sm:%s234]
                %246 = vst [vmem:[%s242 + $0x8] sm:%s234] %v245
                %v247 = vld [vmem:[%s241 + $0x20] sm:%s234]
                %248 = vst [vmem:[%s242 + $0x10] sm:%s234] %v247
                %v249 = vld [vmem:[%s241 + $0x30] sm:%s234]
                %250 = vst [vmem:[%s242 + $0x18] sm:%s234] %v249
                %v251 = vld [vmem:[%s241 + $0x40] sm:%s234]
                %252 = vst [vmem:[%s242 + $0x20] sm:%s234] %v251
              $region41: #{image_formation.1} parent=35 // loop_footer
                %s240 = sadd.s32 1, %s236
              $region42: #{image_formation.1} parent=35 // loop_footer_branch
                %235 = sbr.rel target = $region38
              $region43: #{image_formation.1} parent=35 // loop_exit
                _
            $region36: #{image_formation.1} parent=27 // pred_fallthru
              _
          $region28: #{image_formation.1} parent=23 // pred_fallthru
            _
          %275 = vnop
        $region24: #{image_formation.1} parent=15 // pred_fallthru
          _
        // Predicated region
        $region59: #{image_formation.1} parent=15 // pred_check
          %p276 = pneg %p100
        $region60: #{image_formation.1} parent=15 // pred_check_branch
          %278 = sbr.rel (%p276) target = $region62
        $region61: #{image_formation.1} parent=15 // pred_region
          %p279 = scmp.lt.s32.totalorder %s19, 1
          %s280 = scalar_select %p279, %s19, 1
          %p281 = scmp.lt.s32.totalorder %s20, 1
          %s282 = scalar_select %p281, %s20, 1
          %s283 = smul.addr %s280, 2
          %s284 = sadd.s32 %s282, %s283
          %s285 = scalar_lea.vmem %s2, %s284
        $region62: #{image_formation.1} parent=15 // pred_fallthru
          _
        // Predicated region
        $region63: #{image_formation.1} parent=15 // pred_check
          %p286 = pneg %p128
        $region64: #{image_formation.1} parent=15 // pred_check_branch
          %288 = sbr.rel (%p286) target = $region66
        $region65: #{image_formation.1} parent=15 // pred_region
          %p289 = scmp.lt.s32.totalorder %s19, 1
          %s290 = scalar_select %p289, %s19, 1
          %p291 = scmp.lt.s32.totalorder %s20, 1
          %s292 = scalar_select %p291, %s20, 1
          %s293 = smul.addr %s290, 2
          %s294 = sadd.s32 %s292, %s293
          %s295 = scalar_lea.vmem %s3, %s294
        $region66: #{image_formation.1} parent=15 // pred_fallthru
          _
      $region16: #{image_formation.1} parent=5 // pred_fallthru
        _
      %p296 = scmp.le.s32.totalorder 1, %s12
      %p297 = scmp.lt.s32.totalorder %s12, 5
      %p298 = pnand %p296, %p297
      %p299 = pneg %p298
      // Predicated region
      $region67: #{image_formation.1} parent=5 // pred_check
        _
      $region68: #{image_formation.1} parent=5 // pred_check_branch
        %301 = sbr.rel (%p298) target = $region70
      $region69: #{image_formation.1} parent=5 // pred_region
        %s302 = ssub.s32 %s12, 1
        %s303 = sand.u32 %s65, 1
        %s304 = sand.u32 %s65, 1
        %s305 = smul.addr %s304, 40
        %s306 = scalar_lea.vmem [#allocation2], %s305
        // Predicated region
        $region71: #{image_formation.1} parent=69 // pred_check
          %p307 = pneg %p78
        $region72: #{image_formation.1} parent=69 // pred_check_branch
          %309 = sbr.rel (%p307) target = $region74
        $region73: #{image_formation.1} parent=69 // pred_region
          _
        $region74: #{image_formation.1} parent=69 // pred_fallthru
          _
        %p310 = scmp.lt.s32.totalorder %s21, 1
        %s311 = scalar_select %p310, %s21, 1
        %s312 = smul.addr %s311, 4
        %s313 = scalar_lea.vmem %s0, %s312
        %p314 = pneg %p50
        %p315 = pneg %p47
        %s316 = sand.u32 %s65, 1
        %s317 = sand.u32 %s65, 1
        %s318 = smul.addr %s317, 40
        %s319 = scalar_lea.vmem [#allocation2], %s318
        %p320 = pneg %p78
        %p321 = pneg %p75
        %p322 = scmp.lt.s32.totalorder %s21, 1
        %s323 = scalar_select %p322, %s21, 1
        %p324 = scmp.lt.s32.totalorder %s22, 1
        %s325 = scalar_select %p324, %s22, 1
        %s326 = smul.addr %s323, 2
        %s327 = sadd.s32 %s325, %s326
        %s328 = scalar_lea.vmem %s2, %s327
        %p329 = pneg %p106
        %p330 = pneg %p103
        %p331 = scmp.lt.s32.totalorder %s21, 1
        %s332 = scalar_select %p331, %s21, 1
        %p333 = scmp.lt.s32.totalorder %s22, 1
        %s334 = scalar_select %p333, %s22, 1
        %s335 = smul.addr %s332, 2
        %s336 = sadd.s32 %s334, %s335
        %s337 = scalar_lea.vmem %s3, %s336
        %p338 = pneg %p134
        %p339 = pneg %p131
        %p340 = pneg %p162
        %p341 = pneg %p159
        %p342 = scmp.lt.s32.totalorder %s21, 1
        %s343 = scalar_select %p342, %s21, 1
        %p344 = scmp.lt.s32.totalorder %s22, 1
        %s345 = scalar_select %p344, %s22, 1
        %s346 = smul.addr %s343, 2
        %s347 = sadd.s32 %s345, %s346
        %s348 = smul.addr %s347, 4
        %s349 = scalar_lea.vmem %s4, %s348
        %p350 = pneg %p190
        %p351 = pneg %p187
        %p352 = scmp.lt.s32.totalorder %s21, 1
        %s353 = scalar_select %p352, %s21, 1
        %p354 = scmp.lt.s32.totalorder %s22, 1
        %s355 = scalar_select %p354, %s22, 1
        %s356 = smul.addr %s353, 2
        %s357 = sadd.s32 %s355, %s356
        %s358 = smul.addr %s357, 4
        %s359 = scalar_lea.vmem %s5, %s358
        %p360 = scmp.lt.s32.totalorder %s21, 1
        %s361 = scalar_select %p360, %s21, 1
        %s362 = smul.addr %s361, 4
        %s363 = scalar_lea.vmem %s0, %s362
        %p364 = scmp.lt.s32.totalorder %s21, 1
        %s365 = scalar_select %p364, %s21, 1
        %p366 = scmp.lt.s32.totalorder %s22, 1
        %s367 = scalar_select %p366, %s22, 1
        %s368 = smul.addr %s365, 2
        %s369 = sadd.s32 %s367, %s368
        %s370 = scalar_lea.vmem %s2, %s369
        %p371 = scmp.lt.s32.totalorder %s21, 1
        %s372 = scalar_select %p371, %s21, 1
        %p373 = scmp.lt.s32.totalorder %s22, 1
        %s374 = scalar_select %p373, %s22, 1
        %s375 = smul.addr %s372, 2
        %s376 = sadd.s32 %s374, %s375
        %s377 = scalar_lea.vmem %s3, %s376
        %p378 = scmp.lt.s32.totalorder %s21, 1
        %s379 = scalar_select %p378, %s21, 1
        %p380 = scmp.lt.s32.totalorder %s22, 1
        %s381 = scalar_select %p380, %s22, 1
        %s382 = smul.addr %s379, 2
        %s383 = sadd.s32 %s381, %s382
        %s384 = smul.addr %s383, 4
        %s385 = scalar_lea.vmem %s4, %s384
        %p386 = scmp.lt.s32.totalorder %s21, 1
        %s387 = scalar_select %p386, %s21, 1
        %p388 = scmp.lt.s32.totalorder %s22, 1
        %s389 = scalar_select %p388, %s22, 1
        %s390 = smul.addr %s387, 2
        %s391 = sadd.s32 %s389, %s390
        %s392 = smul.addr %s391, 4
        %s393 = scalar_lea.vmem %s5, %s392
        %v394 = vld [vmem:[%s363] sm:$0x7]
        %v395 = vld [vmem:[%s306] sm:$0xff]
        %v396 = vld [vmem:[%s306 + $0x8] sm:$0xff]
        %v397 = vld [vmem:[%s306 + $0x10] sm:$0xff]
        %v398 = vld [vmem:[%s306 + $0x18] sm:$0xff]
        %v399 = vld [vmem:[%s306 + $0x20] sm:$0x1]
        %v400 = vld [vmem:[%s370] sm:$0x1]
        %v401 = vld [vmem:[%s377] sm:$0x1]
        %vm402 = vcmask 269312
        %v404 = vsel %vm402, %v394, 0
        %vm406 = vcmask 1040384
        %v408 = vsel %vm406, %v399, 0
        %410 = vmatprep.subr.mxu0 0.0
        %411 = vmatpush1.msra.mxu0 0.0
        %412 = vmatprep.subr.mxu0 0.0
        %413 = vmatpush1.msra.mxu0 0.0
        %414 = vmatprep.subr.mxu0 0.0
        %415 = vmatpush1.msra.mxu0 0.0
        %416 = vmatprep.subr.mxu0 0.0
        %417 = vmatpush1.msra.mxu0 0.0
        %418 = vmatprep.subr.mxu0 0.0
        %419 = vmatpush1.msra.mxu0 0.0
        %420 = vmatprep.subr.mxu0 0.0
        %421 = vmatpush1.msra.mxu0 0.0
        %422 = vmatprep.subr.mxu0 0.0
        %423 = vmatpush1.msra.mxu0 0.0
        %424 = vmatprep.subr.mxu0 0.0
        %425 = vmatpush1.msra.mxu0 0.0
        %426 = vmatprep.subr.mxu0 0.0
        %427 = vmatpush1.msra.mxu0 0.0
        %428 = vmatprep.subr.mxu0 0.0
        %429 = vmatpush1.msra.mxu0 0.0
        %430 = vmatprep.subr.mxu0 0.0
        %431 = vmatpush1.msra.mxu0 0.0
        %432 = vmatprep.subr.mxu0 0.0
        %v433 = vand.u32 %v408, 4294901760
        %434 = vmatpush1.msra.mxu0 %v433
        %435 = vmatprep.subr.mxu0 0.0
        %v436 = vand.u32 %v398, 4294901760
        %437 = vmatpush1.msra.mxu0 %v436
        %438 = vmatprep.subr.mxu0 0.0
        %v439 = vand.u32 %v397, 4294901760
        %440 = vmatpush1.msra.mxu0 %v439
        %441 = vmatprep.subr.mxu0 0.0
        %v442 = vand.u32 %v396, 4294901760
        %443 = vmatpush1.msra.mxu0 %v442
        %444 = vmatprep.subr.mxu0 0.0
        %v445 = vand.u32 %v395, 4294901760
        %446 = vmatpush1.msra.mxu0 %v445
        %447 = vmatprep.subr.mxu0 0.0
        %448 = vmatpush2.msra.mxu0 0.0
        %449 = vmatprep.subr.mxu0 0.0
        %450 = vmatpush2.msra.mxu0 0.0
        %451 = vmatprep.subr.mxu0 0.0
        %452 = vmatpush2.msra.mxu0 0.0
        %453 = vmatprep.subr.mxu0 0.0
        %454 = vmatpush2.msra.mxu0 0.0
        %455 = vmatprep.subr.mxu0 0.0
        %456 = vmatpush2.msra.mxu0 0.0
        %457 = vmatprep.subr.mxu0 0.0
        %458 = vmatpush2.msra.mxu0 0.0
        %459 = vmatprep.subr.mxu0 0.0
        %460 = vmatpush2.msra.mxu0 0.0
        %461 = vmatprep.subr.mxu0 0.0
        %462 = vmatpush2.msra.mxu0 0.0
        %463 = vmatprep.subr.mxu0 0.0
        %464 = vmatpush2.msra.mxu0 0.0
        %465 = vmatprep.subr.mxu0 0.0
        %466 = vmatpush2.msra.mxu0 0.0
        %467 = vmatprep.subr.mxu0 0.0
        %468 = vmatpush2.msra.mxu0 0.0
        %469 = vmatprep.subr.mxu0 0.0
        %470 = vmatpush2.msra.mxu0 0.0
        %471 = vmatprep.subr.mxu0 0.0
        %472 = vmatpush2.msra.mxu0 0.0
        %473 = vmatprep.subr.mxu0 0.0
        %474 = vmatpush2.msra.mxu0 0.0
        %475 = vmatprep.subr.mxu0 0.0
        %476 = vmatpush2.msra.mxu0 0.0
        %477 = vmatprep.subr.mxu0 0.0
        %478 = vmatpush2.msra.mxu0 0.0
        %479 = vmatprep.mubr.f32.mxu0 0.0
        %v480 = vand.u32 %v404, 4294901760
        %v481 = vsub.f32 %v404, %v480
        %v482 = vand.u32 %v481, 4294901760
        %v483 = vsub.f32 %v481, %v482
        %v484 = vand.u32 %v483, 4294901760
        %485 = vmatmul.mubr.f32.gmra.mxu0 %v484
        %v486 = vpop.f32.mrf.mxu0
        %v487 = vadd.f32 0.0, %v486
        %v488 = vpop.f32.mrf.mxu0
        %489 = vdwg.mxu0
        %490 = vmatprep.subr.mxu0 0.0
        %491 = vmatpush1.msra.mxu0 0.0
        %492 = vmatprep.subr.mxu0 0.0
        %493 = vmatpush1.msra.mxu0 0.0
        %494 = vmatprep.subr.mxu0 0.0
        %495 = vmatpush1.msra.mxu0 0.0
        %496 = vmatprep.subr.mxu0 0.0
        %497 = vmatpush1.msra.mxu0 0.0
        %498 = vmatprep.subr.mxu0 0.0
        %499 = vmatpush1.msra.mxu0 0.0
        %500 = vmatprep.subr.mxu0 0.0
        %501 = vmatpush1.msra.mxu0 0.0
        %502 = vmatprep.subr.mxu0 0.0
        %503 = vmatpush1.msra.mxu0 0.0
        %504 = vmatprep.subr.mxu0 0.0
        %505 = vmatpush1.msra.mxu0 0.0
        %506 = vmatprep.subr.mxu0 0.0
        %507 = vmatpush1.msra.mxu0 0.0
        %508 = vmatprep.subr.mxu0 0.0
        %509 = vmatpush1.msra.mxu0 0.0
        %510 = vmatprep.subr.mxu0 0.0
        %511 = vmatpush1.msra.mxu0 0.0
        %512 = vmatprep.subr.mxu0 0.0
        %v513 = vand.u32 %v408, 4294901760
        %v514 = vsub.f32 %v408, %v513
        %v515 = vand.u32 %v514, 4294901760
        %v516 = vsub.f32 %v514, %v515
        %v517 = vand.u32 %v516, 4294901760
        %518 = vmatpush1.msra.mxu0 %v517
        %519 = vmatprep.subr.mxu0 0.0
        %v520 = vand.u32 %v398, 4294901760
        %v521 = vsub.f32 %v398, %v520
        %v522 = vand.u32 %v521, 4294901760
        %v523 = vsub.f32 %v521, %v522
        %v524 = vand.u32 %v523, 4294901760
        %525 = vmatpush1.msra.mxu0 %v524
        %526 = vmatprep.subr.mxu0 0.0
        %v527 = vand.u32 %v397, 4294901760
        %v528 = vsub.f32 %v397, %v527
        %v529 = vand.u32 %v528, 4294901760
        %v530 = vsub.f32 %v528, %v529
        %v531 = vand.u32 %v530, 4294901760
        %532 = vmatpush1.msra.mxu0 %v531
        %533 = vmatprep.subr.mxu0 0.0
        %v534 = vand.u32 %v396, 4294901760
        %v535 = vsub.f32 %v396, %v534
        %v536 = vand.u32 %v535, 4294901760
        %v537 = vsub.f32 %v535, %v536
        %v538 = vand.u32 %v537, 4294901760
        %539 = vmatpush1.msra.mxu0 %v538
        %540 = vmatprep.subr.mxu0 0.0
        %v541 = vand.u32 %v395, 4294901760
        %v542 = vsub.f32 %v395, %v541
        %v543 = vand.u32 %v542, 4294901760
        %v544 = vsub.f32 %v542, %v543
        %v545 = vand.u32 %v544, 4294901760
        %546 = vmatpush1.msra.mxu0 %v545
        %547 = vmatprep.subr.mxu0 0.0
        %548 = vmatpush2.msra.mxu0 0.0
        %549 = vmatprep.subr.mxu0 0.0
        %550 = vmatpush2.msra.mxu0 0.0
        %551 = vmatprep.subr.mxu0 0.0
        %552 = vmatpush2.msra.mxu0 0.0
        %553 = vmatprep.subr.mxu0 0.0
        %554 = vmatpush2.msra.mxu0 0.0
        %555 = vmatprep.subr.mxu0 0.0
        %556 = vmatpush2.msra.mxu0 0.0
        %557 = vmatprep.subr.mxu0 0.0
        %558 = vmatpush2.msra.mxu0 0.0
        %559 = vmatprep.subr.mxu0 0.0
        %560 = vmatpush2.msra.mxu0 0.0
        %561 = vmatprep.subr.mxu0 0.0
        %562 = vmatpush2.msra.mxu0 0.0
        %563 = vmatprep.subr.mxu0 0.0
        %564 = vmatpush2.msra.mxu0 0.0
        %565 = vmatprep.subr.mxu0 0.0
        %566 = vmatpush2.msra.mxu0 0.0
        %567 = vmatprep.subr.mxu0 0.0
        %568 = vmatpush2.msra.mxu0 0.0
        %569 = vmatprep.subr.mxu0 0.0
        %570 = vmatpush2.msra.mxu0 0.0
        %571 = vmatprep.subr.mxu0 0.0
        %572 = vmatpush2.msra.mxu0 0.0
        %573 = vmatprep.subr.mxu0 0.0
        %574 = vmatpush2.msra.mxu0 0.0
        %575 = vmatprep.subr.mxu0 0.0
        %576 = vmatpush2.msra.mxu0 0.0
        %577 = vmatprep.subr.mxu0 0.0
        %578 = vmatpush2.msra.mxu0 0.0
        %579 = vmatprep.mubr.f32.mxu0 0.0
        %v580 = vand.u32 %v404, 4294901760
        %581 = vmatmul.mubr.f32.gmra.mxu0 %v580
        %v582 = vpop.f32.mrf.mxu0
        %v583 = vadd.f32 %v487, %v582
        %v584 = vpop.f32.mrf.mxu0
        %585 = vdwg.mxu0
        %586 = vmatprep.subr.mxu0 0.0
        %587 = vmatpush1.msra.mxu0 0.0
        %588 = vmatprep.subr.mxu0 0.0
        %589 = vmatpush1.msra.mxu0 0.0
        %590 = vmatprep.subr.mxu0 0.0
        %591 = vmatpush1.msra.mxu0 0.0
        %592 = vmatprep.subr.mxu0 0.0
        %593 = vmatpush1.msra.mxu0 0.0
        %594 = vmatprep.subr.mxu0 0.0
        %595 = vmatpush1.msra.mxu0 0.0
        %596 = vmatprep.subr.mxu0 0.0
        %597 = vmatpush1.msra.mxu0 0.0
        %598 = vmatprep.subr.mxu0 0.0
        %599 = vmatpush1.msra.mxu0 0.0
        %600 = vmatprep.subr.mxu0 0.0
        %601 = vmatpush1.msra.mxu0 0.0
        %602 = vmatprep.subr.mxu0 0.0
        %603 = vmatpush1.msra.mxu0 0.0
        %604 = vmatprep.subr.mxu0 0.0
        %605 = vmatpush1.msra.mxu0 0.0
        %606 = vmatprep.subr.mxu0 0.0
        %607 = vmatpush1.msra.mxu0 0.0
        %608 = vmatprep.subr.mxu0 0.0
        %v609 = vand.u32 %v408, 4294901760
        %v610 = vsub.f32 %v408, %v609
        %611 = vmatpush1.msra.mxu0 %v610
        %612 = vmatprep.subr.mxu0 0.0
        %v613 = vand.u32 %v398, 4294901760
        %v614 = vsub.f32 %v398, %v613
        %615 = vmatpush1.msra.mxu0 %v614
        %616 = vmatprep.subr.mxu0 0.0
        %v617 = vand.u32 %v397, 4294901760
        %v618 = vsub.f32 %v397, %v617
        %619 = vmatpush1.msra.mxu0 %v618
        %620 = vmatprep.subr.mxu0 0.0
        %v621 = vand.u32 %v396, 4294901760
        %v622 = vsub.f32 %v396, %v621
        %623 = vmatpush1.msra.mxu0 %v622
        %624 = vmatprep.subr.mxu0 0.0
        %v625 = vand.u32 %v395, 4294901760
        %v626 = vsub.f32 %v395, %v625
        %627 = vmatpush1.msra.mxu0 %v626
        %628 = vmatprep.subr.mxu0 0.0
        %629 = vmatpush2.msra.mxu0 0.0
        %630 = vmatprep.subr.mxu0 0.0
        %631 = vmatpush2.msra.mxu0 0.0
        %632 = vmatprep.subr.mxu0 0.0
        %633 = vmatpush2.msra.mxu0 0.0
        %634 = vmatprep.subr.mxu0 0.0
        %635 = vmatpush2.msra.mxu0 0.0
        %636 = vmatprep.subr.mxu0 0.0
        %637 = vmatpush2.msra.mxu0 0.0
        %638 = vmatprep.subr.mxu0 0.0
        %639 = vmatpush2.msra.mxu0 0.0
        %640 = vmatprep.subr.mxu0 0.0
        %641 = vmatpush2.msra.mxu0 0.0
        %642 = vmatprep.subr.mxu0 0.0
        %643 = vmatpush2.msra.mxu0 0.0
        %644 = vmatprep.subr.mxu0 0.0
        %645 = vmatpush2.msra.mxu0 0.0
        %646 = vmatprep.subr.mxu0 0.0
        %647 = vmatpush2.msra.mxu0 0.0
        %648 = vmatprep.subr.mxu0 0.0
        %649 = vmatpush2.msra.mxu0 0.0
        %650 = vmatprep.subr.mxu0 0.0
        %651 = vmatpush2.msra.mxu0 0.0
        %652 = vmatprep.subr.mxu0 0.0
        %653 = vmatpush2.msra.mxu0 0.0
        %654 = vmatprep.subr.mxu0 0.0
        %655 = vmatpush2.msra.mxu0 0.0
        %656 = vmatprep.subr.mxu0 0.0
        %657 = vmatpush2.msra.mxu0 0.0
        %658 = vmatprep.subr.mxu0 0.0
        %659 = vmatpush2.msra.mxu0 0.0
        %660 = vmatprep.mubr.f32.mxu0 0.0
        %v661 = vand.u32 %v404, 4294901760
        %v662 = vsub.f32 %v404, %v661
        %663 = vmatmul.mubr.f32.gmra.mxu0 %v662
        %v664 = vpop.f32.mrf.mxu0
        %v665 = vadd.f32 %v583, %v664
        %v666 = vpop.f32.mrf.mxu0
        %667 = vdwg.mxu0
        %668 = vmatprep.subr.mxu0 0.0
        %669 = vmatpush1.msra.mxu0 0.0
        %670 = vmatprep.subr.mxu0 0.0
        %671 = vmatpush1.msra.mxu0 0.0
        %672 = vmatprep.subr.mxu0 0.0
        %673 = vmatpush1.msra.mxu0 0.0
        %674 = vmatprep.subr.mxu0 0.0
        %675 = vmatpush1.msra.mxu0 0.0
        %676 = vmatprep.subr.mxu0 0.0
        %677 = vmatpush1.msra.mxu0 0.0
        %678 = vmatprep.subr.mxu0 0.0
        %679 = vmatpush1.msra.mxu0 0.0
        %680 = vmatprep.subr.mxu0 0.0
        %681 = vmatpush1.msra.mxu0 0.0
        %682 = vmatprep.subr.mxu0 0.0
        %683 = vmatpush1.msra.mxu0 0.0
        %684 = vmatprep.subr.mxu0 0.0
        %685 = vmatpush1.msra.mxu0 0.0
        %686 = vmatprep.subr.mxu0 0.0
        %687 = vmatpush1.msra.mxu0 0.0
        %688 = vmatprep.subr.mxu0 0.0
        %689 = vmatpush1.msra.mxu0 0.0
        %690 = vmatprep.subr.mxu0 0.0
        %v691 = vand.u32 %v408, 4294901760
        %692 = vmatpush1.msra.mxu0 %v691
        %693 = vmatprep.subr.mxu0 0.0
        %v694 = vand.u32 %v398, 4294901760
        %695 = vmatpush1.msra.mxu0 %v694
        %696 = vmatprep.subr.mxu0 0.0
        %v697 = vand.u32 %v397, 4294901760
        %698 = vmatpush1.msra.mxu0 %v697
        %699 = vmatprep.subr.mxu0 0.0
        %v700 = vand.u32 %v396, 4294901760
        %701 = vmatpush1.msra.mxu0 %v700
        %702 = vmatprep.subr.mxu0 0.0
        %v703 = vand.u32 %v395, 4294901760
        %704 = vmatpush1.msra.mxu0 %v703
        %705 = vmatprep.subr.mxu0 0.0
        %706 = vmatpush2.msra.mxu0 0.0
        %707 = vmatprep.subr.mxu0 0.0
        %708 = vmatpush2.msra.mxu0 0.0
        %709 = vmatprep.subr.mxu0 0.0
        %710 = vmatpush2.msra.mxu0 0.0
        %711 = vmatprep.subr.mxu0 0.0
        %712 = vmatpush2.msra.mxu0 0.0
        %713 = vmatprep.subr.mxu0 0.0
        %714 = vmatpush2.msra.mxu0 0.0
        %715 = vmatprep.subr.mxu0 0.0
        %716 = vmatpush2.msra.mxu0 0.0
        %717 = vmatprep.subr.mxu0 0.0
        %718 = vmatpush2.msra.mxu0 0.0
        %719 = vmatprep.subr.mxu0 0.0
        %720 = vmatpush2.msra.mxu0 0.0
        %721 = vmatprep.subr.mxu0 0.0
        %722 = vmatpush2.msra.mxu0 0.0
        %723 = vmatprep.subr.mxu0 0.0
        %724 = vmatpush2.msra.mxu0 0.0
        %725 = vmatprep.subr.mxu0 0.0
        %726 = vmatpush2.msra.mxu0 0.0
        %727 = vmatprep.subr.mxu0 0.0
        %728 = vmatpush2.msra.mxu0 0.0
        %729 = vmatprep.subr.mxu0 0.0
        %730 = vmatpush2.msra.mxu0 0.0
        %731 = vmatprep.subr.mxu0 0.0
        %732 = vmatpush2.msra.mxu0 0.0
        %733 = vmatprep.subr.mxu0 0.0
        %734 = vmatpush2.msra.mxu0 0.0
        %735 = vmatprep.subr.mxu0 0.0
        %736 = vmatpush2.msra.mxu0 0.0
        %737 = vmatprep.mubr.f32.mxu0 0.0
        %v738 = vand.u32 %v404, 4294901760
        %v739 = vsub.f32 %v404, %v738
        %v740 = vand.u32 %v739, 4294901760
        %741 = vmatmul.mubr.f32.gmra.mxu0 %v740
        %v742 = vpop.f32.mrf.mxu0
        %v743 = vadd.f32 %v665, %v742
        %v744 = vpop.f32.mrf.mxu0
        %745 = vdwg.mxu0
        %746 = vmatprep.subr.mxu0 0.0
        %747 = vmatpush1.msra.mxu0 0.0
        %748 = vmatprep.subr.mxu0 0.0
        %749 = vmatpush1.msra.mxu0 0.0
        %750 = vmatprep.subr.mxu0 0.0
        %751 = vmatpush1.msra.mxu0 0.0
        %752 = vmatprep.subr.mxu0 0.0
        %753 = vmatpush1.msra.mxu0 0.0
        %754 = vmatprep.subr.mxu0 0.0
        %755 = vmatpush1.msra.mxu0 0.0
        %756 = vmatprep.subr.mxu0 0.0
        %757 = vmatpush1.msra.mxu0 0.0
        %758 = vmatprep.subr.mxu0 0.0
        %759 = vmatpush1.msra.mxu0 0.0
        %760 = vmatprep.subr.mxu0 0.0
        %761 = vmatpush1.msra.mxu0 0.0
        %762 = vmatprep.subr.mxu0 0.0
        %763 = vmatpush1.msra.mxu0 0.0
        %764 = vmatprep.subr.mxu0 0.0
        %765 = vmatpush1.msra.mxu0 0.0
        %766 = vmatprep.subr.mxu0 0.0
        %767 = vmatpush1.msra.mxu0 0.0
        %768 = vmatprep.subr.mxu0 0.0
        %v769 = vand.u32 %v408, 4294901760
        %v770 = vsub.f32 %v408, %v769
        %v771 = vand.u32 %v770, 4294901760
        %772 = vmatpush1.msra.mxu0 %v771
        %773 = vmatprep.subr.mxu0 0.0
        %v774 = vand.u32 %v398, 4294901760
        %v775 = vsub.f32 %v398, %v774
        %v776 = vand.u32 %v775, 4294901760
        %777 = vmatpush1.msra.mxu0 %v776
        %778 = vmatprep.subr.mxu0 0.0
        %v779 = vand.u32 %v397, 4294901760
        %v780 = vsub.f32 %v397, %v779
        %v781 = vand.u32 %v780, 4294901760
        %782 = vmatpush1.msra.mxu0 %v781
        %783 = vmatprep.subr.mxu0 0.0
        %v784 = vand.u32 %v396, 4294901760
        %v785 = vsub.f32 %v396, %v784
        %v786 = vand.u32 %v785, 4294901760
        %787 = vmatpush1.msra.mxu0 %v786
        %788 = vmatprep.subr.mxu0 0.0
        %v789 = vand.u32 %v395, 4294901760
        %v790 = vsub.f32 %v395, %v789
        %v791 = vand.u32 %v790, 4294901760
        %792 = vmatpush1.msra.mxu0 %v791
        %793 = vmatprep.subr.mxu0 0.0
        %794 = vmatpush2.msra.mxu0 0.0
        %795 = vmatprep.subr.mxu0 0.0
        %796 = vmatpush2.msra.mxu0 0.0
        %797 = vmatprep.subr.mxu0 0.0
        %798 = vmatpush2.msra.mxu0 0.0
        %799 = vmatprep.subr.mxu0 0.0
        %800 = vmatpush2.msra.mxu0 0.0
        %801 = vmatprep.subr.mxu0 0.0
        %802 = vmatpush2.msra.mxu0 0.0
        %803 = vmatprep.subr.mxu0 0.0
        %804 = vmatpush2.msra.mxu0 0.0
        %805 = vmatprep.subr.mxu0 0.0
        %806 = vmatpush2.msra.mxu0 0.0
        %807 = vmatprep.subr.mxu0 0.0
        %808 = vmatpush2.msra.mxu0 0.0
        %809 = vmatprep.subr.mxu0 0.0
        %810 = vmatpush2.msra.mxu0 0.0
        %811 = vmatprep.subr.mxu0 0.0
        %812 = vmatpush2.msra.mxu0 0.0
        %813 = vmatprep.subr.mxu0 0.0
        %814 = vmatpush2.msra.mxu0 0.0
        %815 = vmatprep.subr.mxu0 0.0
        %816 = vmatpush2.msra.mxu0 0.0
        %817 = vmatprep.subr.mxu0 0.0
        %818 = vmatpush2.msra.mxu0 0.0
        %819 = vmatprep.subr.mxu0 0.0
        %820 = vmatpush2.msra.mxu0 0.0
        %821 = vmatprep.subr.mxu0 0.0
        %822 = vmatpush2.msra.mxu0 0.0
        %823 = vmatprep.subr.mxu0 0.0
        %824 = vmatpush2.msra.mxu0 0.0
        %825 = vmatprep.mubr.f32.mxu0 0.0
        %v826 = vand.u32 %v404, 4294901760
        %827 = vmatmul.mubr.f32.gmra.mxu0 %v826
        %v828 = vpop.f32.mrf.mxu0
        %v829 = vadd.f32 %v743, %v828
        %v830 = vpop.f32.mrf.mxu0
        %831 = vdwg.mxu0
        %832 = vmatprep.subr.mxu0 0.0
        %833 = vmatpush1.msra.mxu0 0.0
        %834 = vmatprep.subr.mxu0 0.0
        %835 = vmatpush1.msra.mxu0 0.0
        %836 = vmatprep.subr.mxu0 0.0
        %837 = vmatpush1.msra.mxu0 0.0
        %838 = vmatprep.subr.mxu0 0.0
        %839 = vmatpush1.msra.mxu0 0.0
        %840 = vmatprep.subr.mxu0 0.0
        %841 = vmatpush1.msra.mxu0 0.0
        %842 = vmatprep.subr.mxu0 0.0
        %843 = vmatpush1.msra.mxu0 0.0
        %844 = vmatprep.subr.mxu0 0.0
        %845 = vmatpush1.msra.mxu0 0.0
        %846 = vmatprep.subr.mxu0 0.0
        %847 = vmatpush1.msra.mxu0 0.0
        %848 = vmatprep.subr.mxu0 0.0
        %849 = vmatpush1.msra.mxu0 0.0
        %850 = vmatprep.subr.mxu0 0.0
        %851 = vmatpush1.msra.mxu0 0.0
        %852 = vmatprep.subr.mxu0 0.0
        %853 = vmatpush1.msra.mxu0 0.0
        %854 = vmatprep.subr.mxu0 0.0
        %v855 = vand.u32 %v408, 4294901760
        %856 = vmatpush1.msra.mxu0 %v855
        %857 = vmatprep.subr.mxu0 0.0
        %v858 = vand.u32 %v398, 4294901760
        %859 = vmatpush1.msra.mxu0 %v858
        %860 = vmatprep.subr.mxu0 0.0
        %v861 = vand.u32 %v397, 4294901760
        %862 = vmatpush1.msra.mxu0 %v861
        %863 = vmatprep.subr.mxu0 0.0
        %v864 = vand.u32 %v396, 4294901760
        %865 = vmatpush1.msra.mxu0 %v864
        %866 = vmatprep.subr.mxu0 0.0
        %v867 = vand.u32 %v395, 4294901760
        %868 = vmatpush1.msra.mxu0 %v867
        %869 = vmatprep.subr.mxu0 0.0
        %870 = vmatpush2.msra.mxu0 0.0
        %871 = vmatprep.subr.mxu0 0.0
        %872 = vmatpush2.msra.mxu0 0.0
        %873 = vmatprep.subr.mxu0 0.0
        %874 = vmatpush2.msra.mxu0 0.0
        %875 = vmatprep.subr.mxu0 0.0
        %876 = vmatpush2.msra.mxu0 0.0
        %877 = vmatprep.subr.mxu0 0.0
        %878 = vmatpush2.msra.mxu0 0.0
        %879 = vmatprep.subr.mxu0 0.0
        %880 = vmatpush2.msra.mxu0 0.0
        %881 = vmatprep.subr.mxu0 0.0
        %882 = vmatpush2.msra.mxu0 0.0
        %883 = vmatprep.subr.mxu0 0.0
        %884 = vmatpush2.msra.mxu0 0.0
        %885 = vmatprep.subr.mxu0 0.0
        %886 = vmatpush2.msra.mxu0 0.0
        %887 = vmatprep.subr.mxu0 0.0
        %888 = vmatpush2.msra.mxu0 0.0
        %889 = vmatprep.subr.mxu0 0.0
        %890 = vmatpush2.msra.mxu0 0.0
        %891 = vmatprep.subr.mxu0 0.0
        %892 = vmatpush2.msra.mxu0 0.0
        %893 = vmatprep.subr.mxu0 0.0
        %894 = vmatpush2.msra.mxu0 0.0
        %895 = vmatprep.subr.mxu0 0.0
        %896 = vmatpush2.msra.mxu0 0.0
        %897 = vmatprep.subr.mxu0 0.0
        %898 = vmatpush2.msra.mxu0 0.0
        %899 = vmatprep.subr.mxu0 0.0
        %900 = vmatpush2.msra.mxu0 0.0
        %901 = vmatprep.mubr.f32.mxu0 0.0
        %v902 = vand.u32 %v404, 4294901760
        %903 = vmatmul.mubr.f32.gmra.mxu0 %v902
        %v904 = vpop.f32.mrf.mxu0
        %v905 = vadd.f32 %v829, %v904
        %v906 = vpop.f32.mrf.mxu0
        %907 = vdwg.mxu0
        %908 = vst [vmem:[%s393] sm:$0x7] %v905
        %v910 = vlaneseq
        %v911 = vshrl.u32 %v910, 7
        %v912 = vsub.s32 0, %v911
        %v913 = vrot.slane %v400, %v912
        %v915 = vmul.f32 %v905, %v913
        %v917 = vlaneseq
        %v918 = vshrl.u32 %v917, 7
        %v919 = vsub.s32 0, %v918
        %v920 = vrot.slane %v401, %v919
        %v922 = vadd.f32 %v915, %v920
        %923 = vst [vmem:[%s385] sm:$0x7] %v922
        %p924 = scmp.lt.s32.totalorder %s21, 1
        %s925 = scalar_select %p924, %s21, 1
        %p926 = scmp.lt.s32.totalorder %s22, 1
        %s927 = scalar_select %p926, %s22, 1
        %s928 = smul.addr %s925, 2
        %s929 = sadd.s32 %s927, %s928
        %s930 = smul.addr %s929, 4
        %s931 = scalar_lea.vmem %s4, %s930
        %p932 = scmp.lt.s32.totalorder %s21, 1
        %s933 = scalar_select %p932, %s21, 1
        %p934 = scmp.lt.s32.totalorder %s22, 1
        %s935 = scalar_select %p934, %s22, 1
        %s936 = smul.addr %s933, 2
        %s937 = sadd.s32 %s935, %s936
        %s938 = smul.addr %s937, 4
        %s939 = scalar_lea.vmem %s5, %s938
        // Predicated region
        $region75: #{image_formation.1} parent=69 // pred_check
          %p940 = pneg %p159
        $region76: #{image_formation.1} parent=69 // pred_check_branch
          %942 = sbr.rel (%p940) target = $region78
        $region77: #{image_formation.1} parent=69 // pred_region
          _
        $region78: #{image_formation.1} parent=69 // pred_fallthru
          _
        // Predicated region
        $region79: #{image_formation.1} parent=69 // pred_check
          %p943 = pneg %p187
        $region80: #{image_formation.1} parent=69 // pred_check_branch
          %945 = sbr.rel (%p943) target = $region82
        $region81: #{image_formation.1} parent=69 // pred_region
          _
        $region82: #{image_formation.1} parent=69 // pred_fallthru
          _
      $region70: #{image_formation.1} parent=5 // pred_fallthru
        _
      %p946 = scmp.le.s32.totalorder 2, %s12
      // Predicated region
      $region83: #{image_formation.1} parent=5 // pred_check
        %p947 = pneg %p946
      $region84: #{image_formation.1} parent=5 // pred_check_branch
        %949 = sbr.rel (%p947) target = $region86
      $region85: #{image_formation.1} parent=5 // pred_region
        %s950 = ssub.s32 %s12, 2
        // Predicated region
        $region87: #{image_formation.1} parent=85 // pred_check
          %p951 = pneg %p165
        $region88: #{image_formation.1} parent=85 // pred_check_branch
          %953 = sbr.rel (%p951) target = $region90
        $region89: #{image_formation.1} parent=85 // pred_region
          %p954 = scmp.lt.s32.totalorder %s23, 1
          %s955 = scalar_select %p954, %s23, 1
          %p956 = scmp.lt.s32.totalorder %s24, 1
          %s957 = scalar_select %p956, %s24, 1
          %s958 = smul.addr %s955, 2
          %s959 = sadd.s32 %s957, %s958
          %s960 = smul.addr %s959, 4
          %s961 = scalar_lea.vmem %s4, %s960
        $region90: #{image_formation.1} parent=85 // pred_fallthru
          _
        // Predicated region
        $region91: #{image_formation.1} parent=85 // pred_check
          %p962 = pneg %p193
        $region92: #{image_formation.1} parent=85 // pred_check_branch
          %964 = sbr.rel (%p962) target = $region94
        $region93: #{image_formation.1} parent=85 // pred_region
          %p965 = scmp.lt.s32.totalorder %s23, 1
          %s966 = scalar_select %p965, %s23, 1
          %p967 = scmp.lt.s32.totalorder %s24, 1
          %s968 = scalar_select %p967, %s24, 1
          %s969 = smul.addr %s966, 2
          %s970 = sadd.s32 %s968, %s969
          %s971 = smul.addr %s970, 4
          %s972 = scalar_lea.vmem %s5, %s971
        $region94: #{image_formation.1} parent=85 // pred_fallthru
          _
      $region86: #{image_formation.1} parent=5 // pred_fallthru
        _
    $region6: #{image_formation.1} parent=1 // loop_footer
      %s16 = sadd.s32 1, %s12
    $region7: #{image_formation.1} parent=1 // loop_footer_branch
      %11 = sbr.rel target = $region3
    $region8: #{image_formation.1} parent=1 // loop_exit
      _

</llo_original>
